<compile_context>
chip_gen: v5e
topology: v5e:2x2
jax: 0.10.0
libtpu: 0.0.40
codegen_flags: <defaults>
</compile_context>

<pallas_src>
import jax
import jax.numpy as jnp
import numpy as np
from jax.experimental import pallas as pl
from jax.experimental.pallas import tpu as pltpu


def _round_up(x: int, m: int) -> int:
    return ((x + m - 1) // m) * m


def _cdiv(a: int, b: int) -> int:
    return (a + b - 1) // b


def location_layer_forward(attention_weights_cat, w_conv_pt, w_dense_pt):
    """attention_weights_cat: (B, 2, T) float32 (PyTorch NCW layout).
    w_conv_pt: (F, 2, K) PyTorch Conv1d weight (no bias).
    w_dense_pt: (D, F) PyTorch Linear weight (no bias).
    Returns (B, T, D) float32."""
    B, C_in, T = attention_weights_cat.shape
    F_, _, K = w_conv_pt.shape
    D = w_dense_pt.shape[0]
    assert C_in == 2
    # PyTorch 'same'-style padding only preserves length for odd K.
    assert K % 2 == 1, "LocationLayer kernel assumes odd attention_kernel_size"
    pad = (K - 1) // 2

    Kc = _round_up(2 * K, 8)            # contraction dim, sublane aligned
    dp128 = _round_up(D, 128)           # lane-padded output width in VMEM

    # ---- tile sizing ----------------------------------------------------
    # rows/step chosen so 2x(halo input + output) tiles + im2col scratch fit
    # comfortably under ~16 MiB (v5e default scoped VMEM; v6e 32 MiB default,
    # v7x 64 MiB physical).  ~4096 rows/step at the canonical D=128.
    bytes_per_row = 4 * (2 * dp128 + _round_up(Kc, 128) + 2 * 128)
    r_target = max(256, min(4096, ((10 * 1024 * 1024) // bytes_per_row) // 8 * 8))

    TT = min(_round_up(T, 8), r_target)                 # time-tile rows
    # Cap the batch group so the double-buffered halo input block stays small
    # (the (TTH, 2) tile is lane-padded to 128 lanes in VMEM).
    in_block_bytes = 2 * _round_up(TT + K - 1, 8) * 128 * 4
    gb_cap = max(1, (6 * 1024 * 1024) // in_block_bytes)
    GB = max(1, min(B, r_target // TT, gb_cap))          # batches per step

    # v7x: make sure the ("parallel","parallel") grid has >= 2 steps so both
    # TensorCores get work (one harmless extra step on single-TC v5e/v6e).
    if _cdiv(B, GB) * _cdiv(T, TT) < 2:
        if B >= 2:
            GB = (B + 1) // 2
        elif T > 8:
            TT = _round_up(_cdiv(T, 2), 8)

    n_b = _cdiv(B, GB)
    n_t = _cdiv(T, TT)
    T_cov = n_t * TT
    TTH = TT + K - 1                                      # halo'd rows/chunk
    B_round = n_b * GB

    # ---- wrapper glue (tiny data only, ~8 bytes/row of HBM traffic) -----
    # (B, 2, T) -> (B, T, 2); conv 'same' zero padding + cover the last tile.
    x_t = jnp.transpose(attention_weights_cat, (0, 2, 1))
    x_padded = jnp.pad(
        x_t, ((0, B_round - B), (pad, pad + (T_cov - T)), (0, 0)))
    # Per-tile halo chunks (duplicates only K-1 rows per tile):
    # (B_round, n_t, TTH, 2)
    x_chunks = jnp.stack(
        [x_padded[:, j * TT:j * TT + TTH, :] for j in range(n_t)], axis=1)

    # Fuse conv weight (F,2,K) with dense weight (D,F) -> (2K, D), rows (k,c).
    w_fused = jnp.einsum("fck,df->kcd", w_conv_pt, w_dense_pt).reshape(2 * K, D)
    w_fused = jnp.pad(w_fused, ((0, Kc - 2 * K), (0, 0)))            # (Kc, D)

    def kernel(x_ref, w_ref, o_ref, xcol_ref):
        # x_ref:    (GB, 1, TTH, 2)  per-batch zero-padded halo chunk
        # w_ref:    (Kc, D)          fused conv x dense weight (resident)
        # o_ref:    (GB, TT, D)      output tile (true width D, no lane pad)
        # xcol_ref: (GB, TT, Kc)     im2col scratch
        if Kc > 2 * K:
            # Keep zero-padded contraction columns free of stale VMEM
            # (unconditional: scratch is per-core and persists across steps).
            xcol_ref[:, :, 2 * K:] = jnp.zeros(
                (GB, TT, Kc - 2 * K), jnp.float32)
        # In-kernel im2col: K static shifted slice-copies of the halo chunk.
        for k in range(K):
            xcol_ref[:, :, 2 * k:2 * k + 2] = x_ref[:, 0, k:k + TT, :]
        # Single fused (conv x dense) MXU matmul, f32 accumulation.
        y = jnp.dot(xcol_ref[...].reshape(GB * TT, Kc), w_ref[...],
                    preferred_element_type=jnp.float32)
        o_ref[...] = y.reshape(GB, TT, D).astype(o_ref.dtype)

    out = pl.pallas_call(
        kernel,
        out_shape=jax.ShapeDtypeStruct((B, T, D), jnp.float32),
        grid_spec=pltpu.PrefetchScalarGridSpec(
            num_scalar_prefetch=0,
            grid=(n_b, n_t),
            in_specs=[
                pl.BlockSpec((GB, 1, TTH, 2), lambda bi, tj: (bi, tj, 0, 0)),
                pl.BlockSpec((Kc, D), lambda bi, tj: (0, 0)),
            ],
            out_specs=pl.BlockSpec((GB, TT, D), lambda bi, tj: (bi, tj, 0)),
            scratch_shapes=[pltpu.VMEM((GB, TT, Kc), jnp.float32)],
        ),
        compiler_params=pltpu.CompilerParams(
            dimension_semantics=("parallel", "parallel"),
            vmem_limit_bytes=32 * 1024 * 1024,
        ),
    )(x_chunks, w_fused)

    return out


def _reference(attention_weights_cat, w_conv_pt, w_dense_pt):
    """Pure-JAX reference mirroring the PyTorch module."""
    K = w_conv_pt.shape[-1]
    pad = (K - 1) // 2
    conv = jax.lax.conv_general_dilated(
        attention_weights_cat, w_conv_pt,
        window_strides=(1,), padding=[(pad, pad)],
        dimension_numbers=("NCH", "OIH", "NCH"))                    # (B, F, T)
    proc = jnp.transpose(conv, (0, 2, 1))                           # (B, T, F)
    return proc @ w_dense_pt.T                                      # (B, T, D)


if __name__ == "__main__":
    # Module hyperparameters (small but representative).
    attention_n_filters = 4
    attention_kernel_size = 3
    attention_dim = 32
    B, T = 2, 8

    key = jax.random.PRNGKey(0)
    k1, k2, k3 = jax.random.split(key, 3)

    w_conv_pt = 0.1 * jax.random.normal(
        k1, (attention_n_filters, 2, attention_kernel_size), dtype=jnp.float32)
    w_dense_pt = 0.1 * jax.random.normal(
        k2, (attention_dim, attention_n_filters), dtype=jnp.float32)

    attention_weights_cat = jax.random.normal(k3, (B, 2, T), dtype=jnp.float32)

    out = location_layer_forward(attention_weights_cat, w_conv_pt, w_dense_pt)
    out = jax.block_until_ready(out)

    ref = _reference(attention_weights_cat, w_conv_pt, w_dense_pt)
    assert out.shape == (B, T, attention_dim)
    np.testing.assert_allclose(np.asarray(out), np.asarray(ref),
                               rtol=1e-5, atol=1e-5)
    print("KERNEL_OK")
</pallas_src>

<mosaic_0001>
module attributes {stable_mosaic.version = 11 : i64} {
  func.func @kernel(%arg0: i32, %arg1: i32, %arg2: memref<1x1x10x2xf32, #tpu.memory_space<vmem>>, %arg3: memref<8x32xf32, #tpu.memory_space<vmem>>, %arg4: memref<1x8x32xf32, #tpu.memory_space<vmem>>, %arg5: memref<1x8x8xf32, #tpu.memory_space<vmem>>) attributes {dimension_semantics = [#tpu.dimension_semantics<parallel>, #tpu.dimension_semantics<parallel>], iteration_bounds = array<i64: 2, 1>, scalar_prefetch = 0 : i64, scratch_operands = 1 : i64, tpu.core_type = #tpu.core_type<tc>, window_params = [{transform_indices = @transform_0, window_bounds = array<i64: 1, 1, 10, 2>}, {pipeline_mode = #tpu.pipeline_mode<synchronous>, transform_indices = @transform_1, window_bounds = array<i64: 8, 32>}, {transform_indices = @transform_2, window_bounds = array<i64: 1, 8, 32>}]} {
    %cst = arith.constant 0.000000e+00 : f32
    %0 = vector.broadcast %cst : f32 to vector<1x8x2xf32>
    %c0 = arith.constant 0 : index
    %c0_0 = arith.constant 0 : index
    %c6 = arith.constant 6 : index
    %1 = vector.load %arg5[%c0, %c0_0, %c6] : memref<1x8x8xf32, #tpu.memory_space<vmem>>, vector<1x8x2xf32>
    tpu.vector_store %arg5[%c0, %c0_0, %c6], %0 {strides = array<i32>} : memref<1x8x8xf32, #tpu.memory_space<vmem>>, vector<1x8x2xf32>,
    %c0_1 = arith.constant 0 : index
    %c0_2 = arith.constant 0 : index
    %c0_3 = arith.constant 0 : index
    %c0_4 = arith.constant 0 : index
    %2 = vector.load %arg2[%c0_1, %c0_2, %c0_3, %c0_4] : memref<1x1x10x2xf32, #tpu.memory_space<vmem>>, vector<1x1x8x2xf32>
    %3 = vector.shape_cast %2 : vector<1x1x8x2xf32> to vector<1x8x2xf32>
    %c0_5 = arith.constant 0 : index
    %c0_6 = arith.constant 0 : index
    %c0_7 = arith.constant 0 : index
    %4 = vector.load %arg5[%c0_5, %c0_6, %c0_7] : memref<1x8x8xf32, #tpu.memory_space<vmem>>, vector<1x8x2xf32>
    tpu.vector_store %arg5[%c0_5, %c0_6, %c0_7], %3 {strides = array<i32>} : memref<1x8x8xf32, #tpu.memory_space<vmem>>, vector<1x8x2xf32>,
    %c0_8 = arith.constant 0 : index
    %c0_9 = arith.constant 0 : index
    %c1 = arith.constant 1 : index
    %c0_10 = arith.constant 0 : index
    %5 = vector.load %arg2[%c0_8, %c0_9, %c1, %c0_10] : memref<1x1x10x2xf32, #tpu.memory_space<vmem>>, vector<1x1x8x2xf32>
    %6 = vector.shape_cast %5 : vector<1x1x8x2xf32> to vector<1x8x2xf32>
    %c0_11 = arith.constant 0 : index
    %c0_12 = arith.constant 0 : index
    %c2 = arith.constant 2 : index
    %7 = vector.load %arg5[%c0_11, %c0_12, %c2] : memref<1x8x8xf32, #tpu.memory_space<vmem>>, vector<1x8x2xf32>
    tpu.vector_store %arg5[%c0_11, %c0_12, %c2], %6 {strides = array<i32>} : memref<1x8x8xf32, #tpu.memory_space<vmem>>, vector<1x8x2xf32>,
    %c0_13 = arith.constant 0 : index
    %c0_14 = arith.constant 0 : index
    %c2_15 = arith.constant 2 : index
    %c0_16 = arith.constant 0 : index
    %8 = vector.load %arg2[%c0_13, %c0_14, %c2_15, %c0_16] : memref<1x1x10x2xf32, #tpu.memory_space<vmem>>, vector<1x1x8x2xf32>
    %9 = vector.shape_cast %8 : vector<1x1x8x2xf32> to vector<1x8x2xf32>
    %c0_17 = arith.constant 0 : index
    %c0_18 = arith.constant 0 : index
    %c4 = arith.constant 4 : index
    %10 = vector.load %arg5[%c0_17, %c0_18, %c4] : memref<1x8x8xf32, #tpu.memory_space<vmem>>, vector<1x8x2xf32>
    tpu.vector_store %arg5[%c0_17, %c0_18, %c4], %9 {strides = array<i32>} : memref<1x8x8xf32, #tpu.memory_space<vmem>>, vector<1x8x2xf32>,
    %c0_19 = arith.constant 0 : index
    %c0_20 = arith.constant 0 : index
    %c0_21 = arith.constant 0 : index
    %11 = vector.load %arg5[%c0_19, %c0_20, %c0_21] : memref<1x8x8xf32, #tpu.memory_space<vmem>>, vector<1x8x8xf32>
    %12 = vector.shape_cast %11 : vector<1x8x8xf32> to vector<8x8xf32>
    %c0_22 = arith.constant 0 : index
    %c0_23 = arith.constant 0 : index
    %13 = vector.load %arg3[%c0_22, %c0_23] : memref<8x32xf32, #tpu.memory_space<vmem>>, vector<8x32xf32>
    %cst_24 = arith.constant dense<0.000000e+00> : vector<8x32xf32>
    %14 = tpu.matmul %12, %13, %cst_24 {dimension_numbers = #tpu.dot_dimension_numbers<[1], [0], [0], [1], [0, 0, 1, 1], [], []>} : vector<8x8xf32>, vector<8x32xf32>, vector<8x32xf32> -> vector<8x32xf32>
    %15 = vector.shape_cast %14 : vector<8x32xf32> to vector<1x8x32xf32>
    %c0_25 = arith.constant 0 : index
    %c0_26 = arith.constant 0 : index
    %c0_27 = arith.constant 0 : index
    %16 = vector.load %arg4[%c0_25, %c0_26, %c0_27] : memref<1x8x32xf32, #tpu.memory_space<vmem>>, vector<1x8x32xf32>
    tpu.vector_store %arg4[%c0_25, %c0_26, %c0_27], %15 {strides = array<i32>} : memref<1x8x32xf32, #tpu.memory_space<vmem>>, vector<1x8x32xf32>,
    return
  }
  func.func @transform_0(%arg0: i32, %arg1: i32) -> (i32, i32, i32, i32) {
    %c0_i32 = arith.constant 0 : i32
    %c0_i32_0 = arith.constant 0 : i32
    %c0_i32_1 = arith.constant 0 : i32
    return %arg0, %arg1, %c0_i32, %c0_i32_0 : i32, i32, i32, i32
  }
  func.func @transform_1(%arg0: i32, %arg1: i32) -> (i32, i32) {
    %c0_i32 = arith.constant 0 : i32
    %c0_i32_0 = arith.constant 0 : i32
    %c0_i32_1 = arith.constant 0 : i32
    return %c0_i32, %c0_i32_0 : i32, i32
  }
  func.func @transform_2(%arg0: i32, %arg1: i32) -> (i32, i32, i32) {
    %c0_i32 = arith.constant 0 : i32
    %c0_i32_0 = arith.constant 0 : i32
    return %arg0, %arg1, %c0_i32 : i32, i32, i32
  }
}

</mosaic_0001>

<llo_original>
// kernel: tpu_custom_call.1
$region0: #{tpu_custom_call.1}
  #allocation0 [shape = 'u32[]', space=smem, size = 0x4, offset = 0x4, fixed_abs, tag = 'smem constant byte address 0x4 - core index']
  #allocation1 [shape = 'u32[72,128]{1,0:T(1,128)}', space=vmem, size = 0x9000, scoped, tag = 'internal scratch']
  #allocation2 [shape = 'f32[1,8,8]{2,1,0:T(8,128)}', space=vmem, size = 0x1000, scoped, tag = 'scratch operand']
  %s0 = inlined_call_operand.vmem [shape: f32[2,1,10,2], index: 0, kind: input, shape index: {}]
  %s1 = inlined_call_operand.vmem [shape: f32[8,32], index: 1, kind: input, shape index: {}]
  %s2 = inlined_call_operand.hbm [shape: f32[2,8,32], index: 2, kind: output, shape index: {}]
  %s3 = sld [smem:[#allocation0]]
  $region41: #{tpu_custom_call.1} parent=0
    _
  %s5 = ssub.s32 1, %s3
  %s6 = scalar_select 0, %s5, %s3
  $region1: #{tpu_custom_call.1} parent=0
    #allocation3 [shape = 'u8[8192]{0}', space=vmem, size = 0x2000, scoped, tag = 'output window, operand 0']
    #allocation4 [shape = 's32[2]{0}', space=sflag, size = 0x8, scoped, tag = 'scoped memory for tpu_custom_call.1']
    %7 = vsyncpa [#allocation4], 0
    %s8 = scalar_lea.sflag [#allocation4], 1
    %9 = vsyncpa %s8, 0
    loop: start=0, step=1, limit=4
    $region2: #{tpu_custom_call.1} parent=1 // loop_pre_header
      _
    $region3: #{tpu_custom_call.1} parent=1 // loop_header
      %s11 = sphi 0, %s15
      %p12 = scmp.ge.s32.totalorder %s11, 4
      %s18 = sphi 0, %s30
      %s19 = sphi 0, %s26
      %s20 = sphi 0, %s18
      %s21 = sphi 0, %s19
      %s22 = sphi 0, %s20
      %s23 = sphi 0, %s21
      %s35 = sphi 0, %s37
      %s38 = sphi 0, %s35
      %s39 = sphi 0, %s38
      %s55 = sphi 0, %s39
      %s59 = sphi 0, %s59
      %s61 = sphi 0, %s59
      %s62 = sphi 0, %s61
      %s76 = sphi 0, %s62
      %s84 = sphi 0, %s86
      %s87 = sphi 0, %s84
      %s88 = sphi 0, %s87
      %s104 = sphi 0, %s88
    $region4: #{tpu_custom_call.1} parent=1 // loop_header_branch
      %14 = sbr.rel (%p12) target = $region8
    $region5: #{tpu_custom_call.1} parent=1 // loop_body
      %s16 = ssub.s32 %s11, 1
      %s17 = ssub.s32 %s11, 2
      %s24 = sadd.s32 1, %s19
      %p25 = scmp.ge.s32.totalorder %s24, 1
      %s26 = scalar_select %p25, 0, %s24
      %s27 = sadd.s32 1, %s18
      %s28 = scalar_select %p25, %s27, %s18
      %p29 = scmp.ge.s32.totalorder %s28, 2
      %s30 = scalar_select %p29, 0, %s28
      %s31 = ssub.s32 %s18, %s30
      %s32 = ssub.s32 %s19, %s26
      %s33 = sor.u32 %s31, %s32
      %p34 = scmp.eq.s32.totalorder %s33, 0
      %s36 = sadd.s32 %s35, 1
      %s37 = scalar_select %p34, %s35, %s36
      %p40 = pneg %p34
      %p41 = scmp.eq.s32.totalorder %s11, 1
      %p42 = por %p40, %p41
      %p43 = scmp.ne.s32.totalorder %s35, %s38
      %p44 = scmp.eq.s32.totalorder %s11, 0
      %p45 = por %p43, %p44
      %p46 = scmp.ne.s32.totalorder %s35, %s38
      %p47 = scmp.eq.s32.totalorder %s16, 1
      %p48 = por %p46, %p47
      %p49 = scmp.ne.s32.totalorder %s38, %s39
      %p50 = scmp.eq.s32.totalorder %s16, 0
      %p51 = por %p49, %p50
      %p52 = scmp.ne.s32.totalorder %s38, %s39
      %p53 = scmp.eq.s32.totalorder %s17, 1
      %p54 = por %p52, %p53
      %p56 = scmp.ne.s32.totalorder %s39, %s55
      %p57 = scmp.eq.s32.totalorder %s17, 0
      %p58 = por %p56, %p57
      %s60 = sadd.s32 %s59, 1
      %p63 = scmp.eq.s32.totalorder %s11, 1
      %p64 = scmp.ne.s32.totalorder %s59, %s61
      %p65 = scmp.eq.s32.totalorder %s11, 0
      %p66 = por %p64, %p65
      %p67 = scmp.ne.s32.totalorder %s59, %s61
      %p68 = scmp.eq.s32.totalorder %s16, 1
      %p69 = por %p67, %p68
      %p70 = scmp.ne.s32.totalorder %s61, %s62
      %p71 = scmp.eq.s32.totalorder %s16, 0
      %p72 = por %p70, %p71
      %p73 = scmp.ne.s32.totalorder %s61, %s62
      %p74 = scmp.eq.s32.totalorder %s17, 1
      %p75 = por %p73, %p74
      %p77 = scmp.ne.s32.totalorder %s62, %s76
      %p78 = scmp.eq.s32.totalorder %s17, 0
      %p79 = por %p77, %p78
      %s80 = ssub.s32 %s18, %s30
      %s81 = ssub.s32 %s19, %s26
      %s82 = sor.u32 %s80, %s81
      %p83 = scmp.eq.s32.totalorder %s82, 0
      %s85 = sadd.s32 %s84, 1
      %s86 = scalar_select %p83, %s84, %s85
      %p89 = pneg %p83
      %p90 = scmp.eq.s32.totalorder %s11, 1
      %p91 = por %p89, %p90
      %p92 = scmp.ne.s32.totalorder %s84, %s87
      %p93 = scmp.eq.s32.totalorder %s11, 0
      %p94 = por %p92, %p93
      %p95 = scmp.ne.s32.totalorder %s84, %s87
      %p96 = scmp.eq.s32.totalorder %s16, 1
      %p97 = por %p95, %p96
      %p98 = scmp.ne.s32.totalorder %s87, %s88
      %p99 = scmp.eq.s32.totalorder %s16, 0
      %p100 = por %p98, %p99
      %p101 = scmp.ne.s32.totalorder %s87, %s88
      %p102 = scmp.eq.s32.totalorder %s17, 1
      %p103 = por %p101, %p102
      %p105 = scmp.ne.s32.totalorder %s88, %s104
      %p106 = scmp.eq.s32.totalorder %s17, 0
      %p107 = por %p105, %p106
      %p108 = scmp.le.s32.totalorder 1, %s11
      %p109 = scmp.lt.s32.totalorder %s11, 3
      %p110 = pnand %p108, %p109
      %p111 = pneg %p110
      // Predicated region
      $region9: #{tpu_custom_call.1} parent=5 // pred_check
        _
      $region10: #{tpu_custom_call.1} parent=5 // pred_check_branch
        %113 = sbr.rel (%p110) target = $region12
      $region11: #{tpu_custom_call.1} parent=5 // pred_region
        %s114 = ssub.s32 %s11, 1
        // Predicated region
        $region13: #{tpu_custom_call.1} parent=11 // pred_check
          %p115 = pneg %p72
        $region14: #{tpu_custom_call.1} parent=11 // pred_check_branch
          %117 = sbr.rel (%p115) target = $region16
        $region15: #{tpu_custom_call.1} parent=11 // pred_region
          _
        $region16: #{tpu_custom_call.1} parent=11 // pred_fallthru
          _
      $region12: #{tpu_custom_call.1} parent=5 // pred_fallthru
        _
      %p118 = scmp.lt.s32.totalorder %s11, 2
      // Predicated region
      $region17: #{tpu_custom_call.1} parent=5 // pred_check
        %p119 = pneg %p118
      $region18: #{tpu_custom_call.1} parent=5 // pred_check_branch
        %121 = sbr.rel (%p119) target = $region20
      $region19: #{tpu_custom_call.1} parent=5 // pred_region
        // Predicated region
        $region21: #{tpu_custom_call.1} parent=19 // pred_check
          %p122 = pneg %p45
        $region22: #{tpu_custom_call.1} parent=19 // pred_check_branch
          %124 = sbr.rel (%p122) target = $region24
        $region23: #{tpu_custom_call.1} parent=19 // pred_region
          %p125 = scmp.lt.s32.totalorder %s18, 1
          %s126 = scalar_select %p125, %s18, 1
          %p127 = scmp.lt.s32.totalorder %s19, 0
          %s128 = scalar_select %p127, %s19, 0
          %s129 = smul.addr %s128, 2
          %s130 = smul.addr %s126, 2
          %s131 = sadd.s32 %s129, %s130
          %s132 = smul.addr %s131, 8
          %s133 = scalar_lea.vmem %s0, %s132
        $region24: #{tpu_custom_call.1} parent=19 // pred_fallthru
          _
      $region20: #{tpu_custom_call.1} parent=5 // pred_fallthru
        _
      %p134 = scmp.le.s32.totalorder 1, %s11
      %p135 = scmp.lt.s32.totalorder %s11, 3
      %p136 = pnand %p134, %p135
      %p137 = pneg %p136
      // Predicated region
      $region25: #{tpu_custom_call.1} parent=5 // pred_check
        _
      $region26: #{tpu_custom_call.1} parent=5 // pred_check_branch
        %139 = sbr.rel (%p136) target = $region28
      $region27: #{tpu_custom_call.1} parent=5 // pred_region
        %s140 = ssub.s32 %s11, 1
        %p141 = scmp.lt.s32.totalorder %s20, 1
        %s142 = scalar_select %p141, %s20, 1
        %p143 = scmp.lt.s32.totalorder %s21, 0
        %s144 = scalar_select %p143, %s21, 0
        %s145 = smul.addr %s144, 2
        %s146 = smul.addr %s142, 2
        %s147 = sadd.s32 %s145, %s146
        %s148 = smul.addr %s147, 8
        %s149 = scalar_lea.vmem %s0, %s148
        %p150 = pneg %p51
        %p151 = pneg %p48
        %p152 = pneg %p72
        %p153 = pneg %p69
        %p154 = pneg %p100
        %p155 = pneg %p97
        %s156 = sand.u32 %s87, 1
        %s157 = scalar_lea.sflag [#allocation4], %s156
        %s158 = sand.u32 %s87, 1
        %s159 = smul.addr %s158, 8
        %s160 = scalar_lea.vmem [#allocation3], %s159
        %p161 = scmp.lt.s32.totalorder %s20, 1
        %s162 = scalar_select %p161, %s20, 1
        %p163 = scmp.lt.s32.totalorder %s21, 0
        %s164 = scalar_select %p163, %s21, 0
        %s165 = smul.addr %s164, 2
        %s166 = smul.addr %s162, 2
        %s167 = sadd.s32 %s165, %s166
        %s168 = smul.addr %s167, 8
        %s169 = scalar_lea.vmem %s0, %s168
        %vm170 = vcmask 64560
        %171 = vst.msk [vmem:[#allocation2] sm:$0xff] %vm170, 0.0
        %v172 = vld [vmem:[%s169] sm:$0xff]
        %vm173 = vcmask 15360
        %174 = vst.msk [vmem:[#allocation2] sm:$0xff] %vm173, %v172
        %v175 = vld [vmem:[%s169 + $0x1] sm:$0xff]
        %177 = vrot.lane.b32.xlu0 %v175, 2
        %v178 = vpop.permute.xlu0 %177
        %vm180 = vcmask 31760
        %181 = vst.msk [vmem:[#allocation2] sm:$0xff] %vm180, %v178
        %v182 = vld [vmem:[%s169 + $0x2] sm:$0xff]
        %184 = vrot.lane.b32.xlu0 %v182, 4
        %v185 = vpop.permute.xlu0 %184
        %vm187 = vcmask 48160
        %188 = vst.msk [vmem:[#allocation2] sm:$0xff] %vm187, %v185
        %v189 = vld [vmem:[#allocation2] sm:$0xff]
        %v190 = vld [vmem:[%s1] sm:$0xff]
        %vm191 = vcmask 64512
        %v193 = vsel %vm191, %v189, 0
        %195 = vmatpush.msra.mxu0 0.0
        %196 = vmatpush.msra.mxu0 0.0
        %197 = vmatpush.msra.mxu0 0.0
        %198 = vmatpush.msra.mxu0 0.0
        %199 = vmatpush.msra.mxu0 0.0
        %200 = vmatpush.msra.mxu0 0.0
        %201 = vmatpush.msra.mxu0 0.0
        %202 = vmatpush.msra.mxu0 0.0
        %203 = vmatpush.msra.mxu0 0.0
        %204 = vmatpush.msra.mxu0 0.0
        %205 = vmatpush.msra.mxu0 0.0
        %206 = vmatpush.msra.mxu0 0.0
        %207 = vmatpush.msra.mxu0 0.0
        %208 = vmatpush.msra.mxu0 0.0
        %209 = vmatpush.msra.mxu0 0.0
        %210 = vmatpush.msra.mxu0 %v190
        %211 = vmatmul.f32.gmra.mxu0 %v193
        %v212 = vpop.f32.mrf.mxu0
        %v213 = vadd.f32 0.0, %v212
        %214 = vdwg.mxu0
        %vm215 = vcmask 261120
        %216 = vst.msk [vmem:[%s160] sm:$0xff] %vm215, %v213
        %s217 = sand.u32 %s87, 1
        %s218 = scalar_lea.sflag [#allocation4], %s217
        %s219 = sand.u32 %s87, 1
        %s220 = smul.addr %s219, 8
        %s221 = scalar_lea.vmem [#allocation3], %s220
        // Predicated region
        $region29: #{tpu_custom_call.1} parent=27 // pred_check
          %p222 = pneg %p97
        $region30: #{tpu_custom_call.1} parent=27 // pred_check_branch
          %224 = sbr.rel (%p222) target = $region32
        $region31: #{tpu_custom_call.1} parent=27 // pred_region
          %226 = vsyncadd %s218, 0
          %s227 = sadd.s32 %s21, %s20
          %s228 = smul.addr %s227, 8
          %s229 = scalar_lea.hbm %s2, %s228
          %s231 = sshll.u32 %s221, 4
          %s232 = int_to_ptr.vmem [resolvable:$true] %s231
          %s233 = sshll.u32 %s229, 4
          %s234 = int_to_ptr.hbm [resolvable:$true] %s233
          %236 = dma.vmem_to_hbm [thread:$0]  %s232, 128, %s234, %s218
        $region32: #{tpu_custom_call.1} parent=27 // pred_fallthru
          _
      $region28: #{tpu_custom_call.1} parent=5 // pred_fallthru
        _
      %p237 = scmp.le.s32.totalorder 2, %s11
      // Predicated region
      $region33: #{tpu_custom_call.1} parent=5 // pred_check
        %p238 = pneg %p237
      $region34: #{tpu_custom_call.1} parent=5 // pred_check_branch
        %240 = sbr.rel (%p238) target = $region36
      $region35: #{tpu_custom_call.1} parent=5 // pred_region
        %s241 = ssub.s32 %s11, 2
        // Predicated region
        $region37: #{tpu_custom_call.1} parent=35 // pred_check
          %p242 = pneg %p103
        $region38: #{tpu_custom_call.1} parent=35 // pred_check_branch
          %244 = sbr.rel (%p242) target = $region40
        $region39: #{tpu_custom_call.1} parent=35 // pred_region
          %s245 = sand.u32 %s88, 1
          %s246 = scalar_lea.sflag [#allocation4], %s245
          %s247 = sand.u32 %s88, 1
          %s248 = smul.addr %s247, 8
          %s249 = scalar_lea.vmem [#allocation3], %s248
          %251 = dma.done %s246, 128
        $region40: #{tpu_custom_call.1} parent=35 // pred_fallthru
          _
      $region36: #{tpu_custom_call.1} parent=5 // pred_fallthru
        _
    $region6: #{tpu_custom_call.1} parent=1 // loop_footer
      %s15 = sadd.s32 1, %s11
    $region7: #{tpu_custom_call.1} parent=1 // loop_footer_branch
      %10 = sbr.rel target = $region3
    $region8: #{tpu_custom_call.1} parent=1 // loop_exit
      _
    %252 = vsyncpa [#allocation4], 1
    %s253 = scalar_lea.sflag [#allocation4], 1
    %254 = vsyncpa %s253, 1

</llo_original>
